<compile_context>
chip_gen: v7x
topology: tpu7x:2x2x1
jax: 0.10.0
libtpu: 0.0.40
codegen_flags: <defaults>
</compile_context>

<pallas_src>
import jax
import jax.numpy as jnp
from jax import lax
from jax.experimental import pallas as pl
from jax.experimental.pallas import tpu as pltpu


def _round_up(n: int, m: int) -> int:
    return ((n + m - 1) // m) * m


def _sublane(dtype) -> int:
    # sublane packing multiple for the second-to-last block dim
    return {4: 8, 2: 16, 1: 32}[jnp.dtype(dtype).itemsize]


def _vmem_limit(single_copy_block_bytes: int) -> int:
    # 2x for double buffering + 25% / 2 MiB slack for compiler-internal scratch;
    # floored at the smallest default scoped limit, capped below physical VMEM.
    est = int(2 * single_copy_block_bytes * 1.25) + (2 << 20)
    return int(min(max(est, 16 << 20), 120 << 20))


# --------------------- prologue: fused weight  WR = W @ R -------------------------
def fuse_weight(W, R, out_dtype=jnp.float32):
    # One-shot (Dout, Din) x (Din, Din) GEMM; XLA already tiles this optimally,
    # so no Pallas prologue (avoids W + R + WR needing to be fully VMEM-resident).
    return jnp.dot(
        W.astype(jnp.float32), R.astype(jnp.float32),
        preferred_element_type=jnp.float32,
    ).astype(out_dtype)


# ----------------------------- kernel 1: fused linear -----------------------------
def fused_linear_kernel(x_ref, wr_ref, b_ref, y_ref):
    # y_tile = x_tile @ WR_tile^T + b_tile   (contract last dims; WR consumed in
    # native orientation, no explicit transpose).
    y = lax.dot_general(
        x_ref[...], wr_ref[...],
        dimension_numbers=(((1,), (1,)), ((), ())),
        preferred_element_type=jnp.float32,
    )
    y_ref[...] = (y + b_ref[...]).astype(y_ref.dtype)


def fused_linear(x, WR, b, *, tm: int = 512, tn_out: int = 256):
    """y = x @ WR^T + b, tiled over (B*L rows, Dout) with Din resident per block."""
    B, L, Din = x.shape
    Dout = WR.shape[0]
    rows = B * L
    cdt = WR.dtype                             # gemm compute dtype (set by caller)
    itemsize = jnp.dtype(cdt).itemsize

    x2d = x.reshape(rows, Din).astype(cdt)
    b2d = b.reshape(1, Dout).astype(jnp.float32)

    # Pad Dout once at the weight level so every output block is lane-dense
    # (unmasked vst); padded columns are zero and sliced away afterwards.
    dout_pad = _round_up(Dout, 128)
    if dout_pad != Dout:
        WR = jnp.pad(WR, ((0, dout_pad - Dout), (0, 0)))
        b2d = jnp.pad(b2d, ((0, 0), (0, dout_pad - Dout)))

    sub = _sublane(cdt)
    tm = max(sub, _round_up(min(tm, rows), sub))
    tn_out = min(max(128, _round_up(min(tn_out, dout_pad), 128)), dout_pad)

    # No host-side row padding: ragged last row-block is handled by Pallas
    # masked output stores (garbage tail inputs only feed masked output rows).
    grid = (pl.cdiv(rows, tm), pl.cdiv(dout_pad, tn_out))

    block_bytes = (tm * Din * itemsize          # streamed activation tile
                   + tn_out * Din * itemsize    # weight tile
                   + tn_out * 4                 # bias tile
                   + tm * tn_out * 4)           # output tile (f32)

    y2d = pl.pallas_call(
        fused_linear_kernel,
        out_shape=jax.ShapeDtypeStruct((rows, dout_pad), jnp.float32),
        grid=grid,
        in_specs=[
            pl.BlockSpec((tm, Din), lambda i, j: (i, 0)),       # activations
            pl.BlockSpec((tn_out, Din), lambda i, j: (j, 0)),   # weight tile
            pl.BlockSpec((1, tn_out), lambda i, j: (0, j)),     # bias tile
        ],
        out_specs=pl.BlockSpec((tm, tn_out), lambda i, j: (i, j)),
        compiler_params=pltpu.CompilerParams(
            dimension_semantics=("parallel", "parallel"),
            vmem_limit_bytes=_vmem_limit(block_bytes),
        ),
    )(x2d, WR, b2d)
    # TODO(synk): add a Din reduction grid axis with a VMEM accumulator if Din
    # grows so large that a (tm, Din) + (tn_out, Din) pair no longer fits VMEM.
    return y2d[:, :Dout].reshape(B, L, Dout)


# --------------------- kernel 2: decorrelation partial stats ----------------------
def make_decorr_stats_kernel(n_total: int, tn: int, tiles_per_split: int):
    def kernel(xs_ref, r_ref, m_ref, cw_ref, s_acc):
        s = pl.program_id(0)
        i = pl.program_id(1)

        @pl.when(i == 0)
        def _():
            m_ref[...] = jnp.zeros_like(m_ref)
            s_acc[0] = jnp.float32(0.0)
            s_acc[1] = jnp.float32(0.0)

        # NaN-safe valid-row mask: handles the ragged tail and surplus blocks
        # without any host-side padding of the sampled rows.
        blk = s * tiles_per_split + i
        ridx = blk * tn + lax.broadcasted_iota(jnp.int32, (tn, 1), 0)
        valid = ridx < n_total                               # (tn, 1) bool

        # Xd tile = Xs @ R^T   (TN, D), f32 accumulation, no explicit transpose
        xd = lax.dot_general(
            xs_ref[...], r_ref[...],
            dimension_numbers=(((1,), (1,)), ((), ())),
            preferred_element_type=jnp.float32,
        )
        xd = jnp.where(valid, xd, 0.0)

        # M += Xd^T Xd  (contract over the row axis: transposed-lhs MXU form)
        m_ref[...] += lax.dot_general(
            xd, xd,
            dimension_numbers=(((0,), (0,)), ((), ())),
            preferred_element_type=jnp.float32,
        )

        x2 = xd * xd
        s2 = jnp.sum(x2, axis=1, keepdims=True)          # (TN, 1)  sum_i x_i^2
        s4 = jnp.sum(x2 * x2, axis=1, keepdims=True)     # (TN, 1)  sum_i x_i^4
        s_acc[0] += jnp.sum(s2 * s2 - s4)                # correlation sum
        # whitening: zeroed (invalid) rows would add D each -> mask per row
        whit_row = jnp.sum((x2 - 1.0) ** 2, axis=1, keepdims=True)
        s_acc[1] += jnp.sum(jnp.where(valid, whit_row, 0.0))

        # publish running per-split sums (cheap 8x128 store each step)
        r_i = lax.broadcasted_iota(jnp.int32, (8, 128), 0)
        c_i = lax.broadcasted_iota(jnp.int32, (8, 128), 1)
        cw_ref[...] = (jnp.where((r_i == 0) & (c_i == 0), s_acc[0], 0.0)
                       + jnp.where((r_i == 1) & (c_i == 0), s_acc[1], 0.0))

    return kernel


def decorr_stats(selected_2d, R, kappa: float, *, tn: int = 512, num_splits: int = 1):
    """Returns (grad (D,D), corr_loss, whit_loss) for the sampled, decorrelated rows."""
    N, D = selected_2d.shape
    xs = selected_2d.astype(jnp.float32)
    r = R.astype(jnp.float32)

    tn = max(8, _round_up(min(tn, N), 8))
    n_blocks = pl.cdiv(N, tn)
    num_splits = max(1, min(num_splits, n_blocks))      # >1: use both v7x TCs
    tiles_per_split = pl.cdiv(n_blocks, num_splits)

    def xs_map(s, i):
        blk = s * tiles_per_split + i
        return (jnp.minimum(blk, n_blocks - 1), 0)      # surplus blocks are masked

    kernel = make_decorr_stats_kernel(N, tn, tiles_per_split)

    block_bytes = (tn * D * 4          # streamed sampled rows
                   + D * D * 4         # resident decorr matrix
                   + D * D * 4         # per-split M partial (output, resident)
                   + 8 * 128 * 4)      # per-split scalar-sums tile

    m_partial, cw_partial = pl.pallas_call(
        kernel,
        out_shape=(
            jax.ShapeDtypeStruct((num_splits, D, D), jnp.float32),
            jax.ShapeDtypeStruct((num_splits, 8, 128), jnp.float32),
        ),
        grid=(num_splits, tiles_per_split),
        in_specs=[
            pl.BlockSpec((tn, D), xs_map),                      # streamed rows
            pl.BlockSpec((D, D), lambda s, i: (0, 0)),          # resident R
        ],
        out_specs=(
            pl.BlockSpec((None, D, D), lambda s, i: (s, 0, 0)),     # M partial
            pl.BlockSpec((None, 8, 128), lambda s, i: (s, 0, 0)),   # loss partials
        ),
        scratch_shapes=[pltpu.SMEM((2,), jnp.float32)],   # [corr_sum, whit_sum]
        compiler_params=pltpu.CompilerParams(
            dimension_semantics=("parallel", "arbitrary"),
            vmem_limit_bytes=_vmem_limit(block_bytes),
        ),
    )(xs, r)
    # TODO(synk): for D >~ 1.5-2K (v7x 64 MiB/TC) add a D-column grid axis so
    # R / M-partials are tiled rather than fully resident.
    # TODO(synk): gather the sampled rows inside the kernel via
    # PrefetchScalarGridSpec row indices to skip the take_along_axis HBM round-trip.

    # Tiny host-side finalize (one D x D elementwise pass) combining the
    # per-split partials, so the reduction can be sharded across TensorCores.
    M = jnp.sum(m_partial, axis=0) / N
    on_diag = jnp.eye(D, dtype=bool)
    grad = (1.0 - kappa) * M + jnp.where(on_diag, (2.0 * kappa - 1.0) * M - kappa, 0.0)
    inv = 1.0 / (N * D * D)
    corr = jnp.sum(cw_partial[:, 0, 0]) * inv
    whit = jnp.sum(cw_partial[:, 1, 0]) * inv
    return grad, corr, whit


# ------------------------------- DecorrLinear forward ------------------------------
def decorr_linear_forward(x, W, R, b, *, sample_frac: float, kappa: float,
                          sample_key, tm: int = 512, tn_out: int = 256,
                          tn: int = 512, num_splits: int = 1,
                          gemm_dtype=jnp.float32):
    """Returns (y, grad, correlation_loss, whitening_loss, selected_2d), mirroring
    the module's forward output plus the state it stashes on `self`.

    gemm_dtype: set jnp.bfloat16 on v5e/v6e/v7x for native-rate MXU and half the
    streamed HBM bytes on the main GEMM (f32 accumulation preserved); the stats
    kernel always runs f32.  num_splits=2 uses both v7x TensorCores for the
    stats reduction.
    """
    # Prologue: fuse the decorrelation matrix into the weight ONCE, in gemm_dtype.
    WR = fuse_weight(W, R, out_dtype=gemm_dtype)       # (Dout, Din)

    # Main path: y = x @ WR^T + b, tiled over rows and Dout, pipelined.
    y = fused_linear(x, WR, b, tm=tm, tn_out=tn_out)

    # Subsample rows per batch (uniform without replacement) via argsort-of-uniform.
    B, L, Din = x.shape
    n_samples = int(sample_frac * L)
    u = jax.random.uniform(sample_key, (B, L))
    sample_idx = jnp.argsort(u, axis=1)[:, :n_samples]            # (B, n)
    selected = jnp.take_along_axis(x, sample_idx[..., None], axis=1)
    selected_2d = selected.reshape(B * n_samples, Din)

    grad, corr_loss, whit_loss = decorr_stats(
        selected_2d, R, kappa, tn=tn, num_splits=num_splits)
    return y, grad, corr_loss, whit_loss, selected_2d


# ----------------------------------------- main ------------------------------------
if __name__ == "__main__":
    B, L, Din, Dout = 2, 64, 32, 64
    sample_frac, kappa = 0.5, 0.5

    key = jax.random.PRNGKey(0)
    k_w, k_b, k_x, k_r, k_s = jax.random.split(key, 5)

    # nn.Linear-like uniform init; decorr matrix = identity + small perturbation
    # (exercises the R path; the module initializes at identity but R trains).
    bound = 1.0 / (Din ** 0.5)
    W = jax.random.uniform(k_w, (Dout, Din), jnp.float32, -bound, bound)
    b = jax.random.uniform(k_b, (Dout,), jnp.float32, -bound, bound)
    R = jnp.eye(Din, dtype=jnp.float32) + 0.01 * jax.random.normal(k_r, (Din, Din))

    x = jax.random.normal(k_x, (B, L, Din), jnp.float32)

    # Small tiles so the demo exercises multi-step grids and the multi-split
    # partial combine (fused_linear grid (2,1); stats grid (2,2)).
    y, grad, corr_loss, whit_loss, selected_2d = decorr_linear_forward(
        x, W, R, b, sample_frac=sample_frac, kappa=kappa, sample_key=k_s,
        tm=64, tn=16, num_splits=2,
    )
    jax.block_until_ready((y, grad, corr_loss, whit_loss))

    # ---- plain-JAX reference (materialised, mirrors the PyTorch code) ----
    y_ref = x @ (W @ R).T + b
    xd = selected_2d @ R.T
    Dm = jax.vmap(jnp.diag)(xd ** 2)                     # (N, D, D)
    V = Dm - jnp.eye(Din)
    xxT = xd[:, :, None] * xd[:, None, :]
    C = xxT - Dm
    corr_ref = jnp.mean(jnp.mean(C ** 2, axis=(1, 2)))
    whit_ref = jnp.mean(jnp.mean(V ** 2, axis=(1, 2)))
    grad_ref = jnp.mean((1.0 - kappa) * C + kappa * V, axis=0)

    assert jnp.allclose(y, y_ref, atol=1e-4, rtol=1e-4)
    assert jnp.allclose(grad, grad_ref, atol=1e-4, rtol=1e-4)
    assert jnp.allclose(corr_loss, corr_ref, atol=1e-4, rtol=1e-4)
    assert jnp.allclose(whit_loss, whit_ref, atol=1e-4, rtol=1e-4)

    # Fast-path check: bf16 GEMM (native MXU rate) with looser tolerance;
    # stats stay f32 so grad/losses remain tight.
    y_bf, grad_bf, corr_bf, whit_bf, _ = decorr_linear_forward(
        x, W, R, b, sample_frac=sample_frac, kappa=kappa, sample_key=k_s,
        tm=64, tn=16, num_splits=2, gemm_dtype=jnp.bfloat16,
    )
    jax.block_until_ready((y_bf, grad_bf))
    assert jnp.allclose(y_bf, y_ref, atol=5e-2, rtol=5e-2)
    assert jnp.allclose(grad_bf, grad_ref, atol=1e-4, rtol=1e-4)

    print("KERNEL_OK")
</pallas_src>

<mosaic_0001>
module attributes {stable_mosaic.version = 11 : i64} {
  func.func @fused_linear_kernel(%arg0: i32, %arg1: i32, %arg2: memref<64x32xf32, #tpu.memory_space<vmem>>, %arg3: memref<128x32xf32, #tpu.memory_space<vmem>>, %arg4: memref<1x128xf32, #tpu.memory_space<vmem>>, %arg5: memref<64x128xf32, #tpu.memory_space<vmem>>) attributes {dimension_semantics = [#tpu.dimension_semantics<parallel>, #tpu.dimension_semantics<parallel>], iteration_bounds = array<i64: 2, 1>, scalar_prefetch = 0 : i64, scratch_operands = 0 : i64, tpu.core_type = #tpu.core_type<tc>, window_params = [{transform_indices = @transform_0, window_bounds = array<i64: 64, 32>}, {transform_indices = @transform_1, window_bounds = array<i64: 128, 32>}, {transform_indices = @transform_2, window_bounds = array<i64: 1, 128>}, {transform_indices = @transform_3, window_bounds = array<i64: 64, 128>}]} {
    %c0 = arith.constant 0 : index
    %c0_0 = arith.constant 0 : index
    %0 = vector.load %arg2[%c0, %c0_0] : memref<64x32xf32, #tpu.memory_space<vmem>>, vector<64x32xf32>
    %c0_1 = arith.constant 0 : index
    %c0_2 = arith.constant 0 : index
    %1 = vector.load %arg3[%c0_1, %c0_2] : memref<128x32xf32, #tpu.memory_space<vmem>>, vector<128x32xf32>
    %cst = arith.constant dense<0.000000e+00> : vector<64x128xf32>
    %2 = tpu.matmul %0, %1, %cst {dimension_numbers = #tpu.dot_dimension_numbers<[1], [1], [0], [0], [0, 0, 1, 0], [], []>} : vector<64x32xf32>, vector<128x32xf32>, vector<64x128xf32> -> vector<64x128xf32>
    %c0_3 = arith.constant 0 : index
    %c0_4 = arith.constant 0 : index
    %3 = vector.load %arg4[%c0_3, %c0_4] : memref<1x128xf32, #tpu.memory_space<vmem>>, vector<1x128xf32>
    %4 = vector.broadcast %3 : vector<1x128xf32> to vector<64x128xf32>
    %5 = arith.addf %2, %4 : vector<64x128xf32>
    %c0_5 = arith.constant 0 : index
    %c0_6 = arith.constant 0 : index
    %6 = vector.load %arg5[%c0_5, %c0_6] : memref<64x128xf32, #tpu.memory_space<vmem>>, vector<64x128xf32>
    tpu.vector_store %arg5[%c0_5, %c0_6], %5 {strides = array<i32>} : memref<64x128xf32, #tpu.memory_space<vmem>>, vector<64x128xf32>,
    return
  }
  func.func @transform_0(%arg0: i32, %arg1: i32) -> (i32, i32) {
    %c0_i32 = arith.constant 0 : i32
    %c0_i32_0 = arith.constant 0 : i32
    return %arg0, %c0_i32 : i32, i32
  }
  func.func @transform_1(%arg0: i32, %arg1: i32) -> (i32, i32) {
    %c0_i32 = arith.constant 0 : i32
    %c0_i32_0 = arith.constant 0 : i32
    return %arg1, %c0_i32 : i32, i32
  }
  func.func @transform_2(%arg0: i32, %arg1: i32) -> (i32, i32) {
    %c0_i32 = arith.constant 0 : i32
    %c0_i32_0 = arith.constant 0 : i32
    return %c0_i32, %arg1 : i32, i32
  }
  func.func @transform_3(%arg0: i32, %arg1: i32) -> (i32, i32) {
    %c0_i32 = arith.constant 0 : i32
    return %arg0, %arg1 : i32, i32
  }
}

</mosaic_0001>

<llo_original>
// kernel: tpu_custom_call.1
$region0: #{tpu_custom_call.1}
  #allocation0 [shape = 'u32[]', space=smem, size = 0x4, offset = 0x4, fixed_abs, tag = 'smem constant byte address 0x4 - core index']
  #allocation1 [shape = 'u32[144,128]{1,0:T(1,128)}', space=vmem, size = 0x12000, scoped, tag = 'internal scratch']
  %s0 = inlined_call_operand.vmem [shape: f32[128,32], index: 0, kind: input, shape index: {}]
  %s1 = inlined_call_operand.vmem [shape: f32[128,32], index: 1, kind: input, shape index: {}]
  %s2 = inlined_call_operand.vmem [shape: f32[1,128], index: 2, kind: input, shape index: {}]
  %s3 = inlined_call_operand.hbm [shape: f32[128,128], index: 3, kind: output, shape index: {}]
  %s4 = sld [smem:[#allocation0]]
  $region45: #{tpu_custom_call.1} parent=0
    _
  %s6 = ssub.s32 1, %s4
  %s7 = scalar_select 0, %s6, %s4
  $region1: #{tpu_custom_call.1} parent=0
    #allocation2 [shape = 'u8[65536]{0}', space=vmem, size = 0x10000, scoped, tag = 'output window, operand 0']
    #allocation3 [shape = 's32[2]{0}', space=sflag, size = 0x8, scoped, tag = 'scoped memory for tpu_custom_call.1']
    %8 = vsyncpa [#allocation3], 0
    %s9 = scalar_lea.sflag [#allocation3], 1
    %10 = vsyncpa %s9, 0
    loop: start=0, step=1, limit=4
    $region2: #{tpu_custom_call.1} parent=1 // loop_pre_header
      _
    $region3: #{tpu_custom_call.1} parent=1 // loop_header
      %s12 = sphi 0, %s16
      %p13 = scmp.ge.s32.totalorder %s12, 4
      %s19 = sphi 0, %s31
      %s20 = sphi 0, %s27
      %s21 = sphi 0, %s19
      %s22 = sphi 0, %s20
      %s23 = sphi 0, %s21
      %s24 = sphi 0, %s22
      %s34 = sphi 0, %s36
      %s37 = sphi 0, %s34
      %s38 = sphi 0, %s37
      %s54 = sphi 0, %s38
      %s60 = sphi 0, %s62
      %s63 = sphi 0, %s60
      %s64 = sphi 0, %s63
      %s80 = sphi 0, %s64
      %s86 = sphi 0, %s88
      %s89 = sphi 0, %s86
      %s90 = sphi 0, %s89
      %s106 = sphi 0, %s90
      %s114 = sphi 0, %s116
      %s117 = sphi 0, %s114
      %s118 = sphi 0, %s117
      %s134 = sphi 0, %s118
    $region4: #{tpu_custom_call.1} parent=1 // loop_header_branch
      %15 = sbr.rel (%p13) target = $region8
    $region5: #{tpu_custom_call.1} parent=1 // loop_body
      %s17 = ssub.s32 %s12, 1
      %s18 = ssub.s32 %s12, 2
      %s25 = sadd.s32 1, %s20
      %p26 = scmp.ge.s32.totalorder %s25, 1
      %s27 = scalar_select %p26, 0, %s25
      %s28 = sadd.s32 1, %s19
      %s29 = scalar_select %p26, %s28, %s19
      %p30 = scmp.ge.s32.totalorder %s29, 2
      %s31 = scalar_select %p30, 0, %s29
      %s32 = ssub.s32 %s19, %s31
      %p33 = scmp.eq.s32.totalorder %s32, 0
      %s35 = sadd.s32 %s34, 1
      %s36 = scalar_select %p33, %s34, %s35
      %p39 = pneg %p33
      %p40 = scmp.eq.s32.totalorder %s12, 1
      %p41 = por %p39, %p40
      %p42 = scmp.ne.s32.totalorder %s34, %s37
      %p43 = scmp.eq.s32.totalorder %s12, 0
      %p44 = por %p42, %p43
      %p45 = scmp.ne.s32.totalorder %s34, %s37
      %p46 = scmp.eq.s32.totalorder %s17, 1
      %p47 = por %p45, %p46
      %p48 = scmp.ne.s32.totalorder %s37, %s38
      %p49 = scmp.eq.s32.totalorder %s17, 0
      %p50 = por %p48, %p49
      %p51 = scmp.ne.s32.totalorder %s37, %s38
      %p52 = scmp.eq.s32.totalorder %s18, 1
      %p53 = por %p51, %p52
      %p55 = scmp.ne.s32.totalorder %s38, %s54
      %p56 = scmp.eq.s32.totalorder %s18, 0
      %p57 = por %p55, %p56
      %s58 = ssub.s32 %s20, %s27
      %p59 = scmp.eq.s32.totalorder %s58, 0
      %s61 = sadd.s32 %s60, 1
      %s62 = scalar_select %p59, %s60, %s61
      %p65 = pneg %p59
      %p66 = scmp.eq.s32.totalorder %s12, 1
      %p67 = por %p65, %p66
      %p68 = scmp.ne.s32.totalorder %s60, %s63
      %p69 = scmp.eq.s32.totalorder %s12, 0
      %p70 = por %p68, %p69
      %p71 = scmp.ne.s32.totalorder %s60, %s63
      %p72 = scmp.eq.s32.totalorder %s17, 1
      %p73 = por %p71, %p72
      %p74 = scmp.ne.s32.totalorder %s63, %s64
      %p75 = scmp.eq.s32.totalorder %s17, 0
      %p76 = por %p74, %p75
      %p77 = scmp.ne.s32.totalorder %s63, %s64
      %p78 = scmp.eq.s32.totalorder %s18, 1
      %p79 = por %p77, %p78
      %p81 = scmp.ne.s32.totalorder %s64, %s80
      %p82 = scmp.eq.s32.totalorder %s18, 0
      %p83 = por %p81, %p82
      %s84 = ssub.s32 %s20, %s27
      %p85 = scmp.eq.s32.totalorder %s84, 0
      %s87 = sadd.s32 %s86, 1
      %s88 = scalar_select %p85, %s86, %s87
      %p91 = pneg %p85
      %p92 = scmp.eq.s32.totalorder %s12, 1
      %p93 = por %p91, %p92
      %p94 = scmp.ne.s32.totalorder %s86, %s89
      %p95 = scmp.eq.s32.totalorder %s12, 0
      %p96 = por %p94, %p95
      %p97 = scmp.ne.s32.totalorder %s86, %s89
      %p98 = scmp.eq.s32.totalorder %s17, 1
      %p99 = por %p97, %p98
      %p100 = scmp.ne.s32.totalorder %s89, %s90
      %p101 = scmp.eq.s32.totalorder %s17, 0
      %p102 = por %p100, %p101
      %p103 = scmp.ne.s32.totalorder %s89, %s90
      %p104 = scmp.eq.s32.totalorder %s18, 1
      %p105 = por %p103, %p104
      %p107 = scmp.ne.s32.totalorder %s90, %s106
      %p108 = scmp.eq.s32.totalorder %s18, 0
      %p109 = por %p107, %p108
      %s110 = ssub.s32 %s19, %s31
      %s111 = ssub.s32 %s20, %s27
      %s112 = sor.u32 %s110, %s111
      %p113 = scmp.eq.s32.totalorder %s112, 0
      %s115 = sadd.s32 %s114, 1
      %s116 = scalar_select %p113, %s114, %s115
      %p119 = pneg %p113
      %p120 = scmp.eq.s32.totalorder %s12, 1
      %p121 = por %p119, %p120
      %p122 = scmp.ne.s32.totalorder %s114, %s117
      %p123 = scmp.eq.s32.totalorder %s12, 0
      %p124 = por %p122, %p123
      %p125 = scmp.ne.s32.totalorder %s114, %s117
      %p126 = scmp.eq.s32.totalorder %s17, 1
      %p127 = por %p125, %p126
      %p128 = scmp.ne.s32.totalorder %s117, %s118
      %p129 = scmp.eq.s32.totalorder %s17, 0
      %p130 = por %p128, %p129
      %p131 = scmp.ne.s32.totalorder %s117, %s118
      %p132 = scmp.eq.s32.totalorder %s18, 1
      %p133 = por %p131, %p132
      %p135 = scmp.ne.s32.totalorder %s118, %s134
      %p136 = scmp.eq.s32.totalorder %s18, 0
      %p137 = por %p135, %p136
      %p138 = scmp.le.s32.totalorder 1, %s12
      %p139 = scmp.lt.s32.totalorder %s12, 3
      %p140 = pnand %p138, %p139
      %p141 = pneg %p140
      // Predicated region
      $region9: #{tpu_custom_call.1} parent=5 // pred_check
        _
      $region10: #{tpu_custom_call.1} parent=5 // pred_check_branch
        %143 = sbr.rel (%p140) target = $region12
      $region11: #{tpu_custom_call.1} parent=5 // pred_region
        %s144 = ssub.s32 %s12, 1
        // Predicated region
        $region13: #{tpu_custom_call.1} parent=11 // pred_check
          %p145 = pneg %p76
        $region14: #{tpu_custom_call.1} parent=11 // pred_check_branch
          %147 = sbr.rel (%p145) target = $region16
        $region15: #{tpu_custom_call.1} parent=11 // pred_region
          %s148 = smul.u32 16, %s22
          %p149 = scmp.lt.s32.totalorder %s148, 15
          %s150 = scalar_select %p149, %s148, 15
          %s151 = smul.addr %s150, 8
          %s152 = scalar_lea.vmem %s1, %s151
          %s153 = smul.u32 16, %s22
        $region16: #{tpu_custom_call.1} parent=11 // pred_fallthru
          _
        // Predicated region
        $region17: #{tpu_custom_call.1} parent=11 // pred_check
          %p154 = pneg %p102
        $region18: #{tpu_custom_call.1} parent=11 // pred_check_branch
          %156 = sbr.rel (%p154) target = $region20
        $region19: #{tpu_custom_call.1} parent=11 // pred_region
          %p157 = scmp.lt.s32.totalorder %s22, 0
          %s158 = scalar_select %p157, %s22, 0
          %s159 = scalar_lea.vmem %s2, %s158
        $region20: #{tpu_custom_call.1} parent=11 // pred_fallthru
          _
      $region12: #{tpu_custom_call.1} parent=5 // pred_fallthru
        _
      %p160 = scmp.lt.s32.totalorder %s12, 2
      // Predicated region
      $region21: #{tpu_custom_call.1} parent=5 // pred_check
        %p161 = pneg %p160
      $region22: #{tpu_custom_call.1} parent=5 // pred_check_branch
        %163 = sbr.rel (%p161) target = $region24
      $region23: #{tpu_custom_call.1} parent=5 // pred_region
        // Predicated region
        $region25: #{tpu_custom_call.1} parent=23 // pred_check
          %p164 = pneg %p44
        $region26: #{tpu_custom_call.1} parent=23 // pred_check_branch
          %166 = sbr.rel (%p164) target = $region28
        $region27: #{tpu_custom_call.1} parent=23 // pred_region
          %s167 = smul.u32 8, %s19
          %p168 = scmp.lt.s32.totalorder %s167, 15
          %s169 = scalar_select %p168, %s167, 15
          %s170 = smul.addr %s169, 8
          %s171 = scalar_lea.vmem %s0, %s170
          %s172 = smul.u32 8, %s19
        $region28: #{tpu_custom_call.1} parent=23 // pred_fallthru
          _
      $region24: #{tpu_custom_call.1} parent=5 // pred_fallthru
        _
      %p173 = scmp.le.s32.totalorder 1, %s12
      %p174 = scmp.lt.s32.totalorder %s12, 3
      %p175 = pnand %p173, %p174
      %p176 = pneg %p175
      // Predicated region
      $region29: #{tpu_custom_call.1} parent=5 // pred_check
        _
      $region30: #{tpu_custom_call.1} parent=5 // pred_check_branch
        %178 = sbr.rel (%p175) target = $region32
      $region31: #{tpu_custom_call.1} parent=5 // pred_region
        %s179 = ssub.s32 %s12, 1
        %s180 = smul.u32 8, %s21
        %p181 = scmp.lt.s32.totalorder %s180, 15
        %s182 = scalar_select %p181, %s180, 15
        %s183 = smul.addr %s182, 8
        %s184 = scalar_lea.vmem %s0, %s183
        %p185 = pneg %p50
        %p186 = pneg %p47
        %s187 = smul.u32 16, %s22
        %p188 = scmp.lt.s32.totalorder %s187, 15
        %s189 = scalar_select %p188, %s187, 15
        %s190 = smul.addr %s189, 8
        %s191 = scalar_lea.vmem %s1, %s190
        %p192 = pneg %p76
        %p193 = pneg %p73
        %p194 = scmp.lt.s32.totalorder %s22, 0
        %s195 = scalar_select %p194, %s22, 0
        %s196 = scalar_lea.vmem %s2, %s195
        %p197 = pneg %p102
        %p198 = pneg %p99
        %p199 = pneg %p130
        %p200 = pneg %p127
        %s201 = sand.u32 %s117, 1
        %s202 = scalar_lea.sflag [#allocation3], %s201
        %s203 = sand.u32 %s117, 1
        %s204 = smul.addr %s203, 64
        %s205 = scalar_lea.vmem [#allocation2], %s204
        %s206 = smul.u32 8, %s21
        %p207 = scmp.lt.s32.totalorder %s206, 15
        %s208 = scalar_select %p207, %s206, 15
        %s209 = smul.addr %s208, 8
        %s210 = scalar_lea.vmem %s0, %s209
        %s211 = smul.u32 8, %s21
        %s212 = smul.u32 16, %s22
        %p213 = scmp.lt.s32.totalorder %s212, 15
        %s214 = scalar_select %p213, %s212, 15
        %s215 = smul.addr %s214, 8
        %s216 = scalar_lea.vmem %s1, %s215
        %s217 = smul.u32 16, %s22
        %p218 = scmp.lt.s32.totalorder %s22, 0
        %s219 = scalar_select %p218, %s22, 0
        %s220 = scalar_lea.vmem %s2, %s219
        %s221 = smul.u32 8, %s21
        %v222 = vld [vmem:[%s210] sm:$0xff]
        %v223 = vld [vmem:[%s210 + $0x8] sm:$0xff]
        %v224 = vld [vmem:[%s210 + $0x10] sm:$0xff]
        %v225 = vld [vmem:[%s210 + $0x18] sm:$0xff]
        %v226 = vld [vmem:[%s210 + $0x20] sm:$0xff]
        %v227 = vld [vmem:[%s210 + $0x28] sm:$0xff]
        %v228 = vld [vmem:[%s210 + $0x30] sm:$0xff]
        %v229 = vld [vmem:[%s210 + $0x38] sm:$0xff]
        %v230 = vld [vmem:[%s216] sm:$0xff]
        %v231 = vld [vmem:[%s216 + $0x8] sm:$0xff]
        %v232 = vld [vmem:[%s216 + $0x10] sm:$0xff]
        %v233 = vld [vmem:[%s216 + $0x18] sm:$0xff]
        %v234 = vld [vmem:[%s216 + $0x20] sm:$0xff]
        %v235 = vld [vmem:[%s216 + $0x28] sm:$0xff]
        %v236 = vld [vmem:[%s216 + $0x30] sm:$0xff]
        %v237 = vld [vmem:[%s216 + $0x38] sm:$0xff]
        %v238 = vld [vmem:[%s216 + $0x40] sm:$0xff]
        %v239 = vld [vmem:[%s216 + $0x48] sm:$0xff]
        %v240 = vld [vmem:[%s216 + $0x50] sm:$0xff]
        %v241 = vld [vmem:[%s216 + $0x58] sm:$0xff]
        %v242 = vld [vmem:[%s216 + $0x60] sm:$0xff]
        %v243 = vld [vmem:[%s216 + $0x68] sm:$0xff]
        %v244 = vld [vmem:[%s216 + $0x70] sm:$0xff]
        %v245 = vld [vmem:[%s216 + $0x78] sm:$0xff]
        %v246 = vld [vmem:[%s220] sm:$0x1]
        %v248 = vlaneseq
        %v249 = vshrl.u32 %v248, 7
        %v250 = vsub.s32 0, %v249
        %v251 = vrot.slane %v246, %v250
        %vm253 = vcmask 261120
        %v255 = vsel %vm253, %v222, 0
        %v258 = vsel %vm253, %v223, 0
        %v261 = vsel %vm253, %v224, 0
        %v264 = vsel %vm253, %v225, 0
        %v267 = vsel %vm253, %v226, 0
        %v270 = vsel %vm253, %v227, 0
        %v273 = vsel %vm253, %v228, 0
        %v276 = vsel %vm253, %v229, 0
        %v279 = vsel %vm253, %v230, 0
        %v282 = vsel %vm253, %v231, 0
        %v285 = vsel %vm253, %v232, 0
        %v288 = vsel %vm253, %v233, 0
        %v291 = vsel %vm253, %v234, 0
        %v294 = vsel %vm253, %v235, 0
        %v297 = vsel %vm253, %v236, 0
        %v300 = vsel %vm253, %v237, 0
        %v303 = vsel %vm253, %v238, 0
        %v306 = vsel %vm253, %v239, 0
        %v309 = vsel %vm253, %v240, 0
        %v312 = vsel %vm253, %v241, 0
        %v315 = vsel %vm253, %v242, 0
        %v318 = vsel %vm253, %v243, 0
        %v321 = vsel %vm253, %v244, 0
        %v324 = vsel %vm253, %v245, 0
        %326 = vmatprep.subr.mxu0 0.0
        %327 = vmatpush1.xpose.msra.mxu0 %v279
        %328 = vmatprep.subr.mxu0 0.0
        %329 = vmatpush1.xpose.msra.mxu0 %v282
        %330 = vmatprep.subr.mxu0 0.0
        %331 = vmatpush1.xpose.msra.mxu0 %v285
        %332 = vmatprep.subr.mxu0 0.0
        %333 = vmatpush1.xpose.msra.mxu0 %v288
        %334 = vmatprep.subr.mxu0 0.0
        %335 = vmatpush1.xpose.msra.mxu0 %v291
        %336 = vmatprep.subr.mxu0 0.0
        %337 = vmatpush1.xpose.msra.mxu0 %v294
        %338 = vmatprep.subr.mxu0 0.0
        %339 = vmatpush1.xpose.msra.mxu0 %v297
        %340 = vmatprep.subr.mxu0 0.0
        %341 = vmatpush1.xpose.msra.mxu0 %v300
        %342 = vmatprep.subr.mxu0 0.0
        %343 = vmatpush1.xpose.msra.mxu0 %v303
        %344 = vmatprep.subr.mxu0 0.0
        %345 = vmatpush1.xpose.msra.mxu0 %v306
        %346 = vmatprep.subr.mxu0 0.0
        %347 = vmatpush1.xpose.msra.mxu0 %v309
        %348 = vmatprep.subr.mxu0 0.0
        %349 = vmatpush1.xpose.msra.mxu0 %v312
        %350 = vmatprep.subr.mxu0 0.0
        %351 = vmatpush1.xpose.msra.mxu0 %v315
        %352 = vmatprep.subr.mxu0 0.0
        %353 = vmatpush1.xpose.msra.mxu0 %v318
        %354 = vmatprep.subr.mxu0 0.0
        %355 = vmatpush1.xpose.msra.mxu0 %v321
        %356 = vmatprep.subr.mxu0 0.0
        %357 = vmatpush1.xpose.msra.mxu0 %v324
        %358 = vmatprep.subr.mxu0 0.0
        %359 = vmatpush1.xpose.msra.mxu0 0.0
        %360 = vmatprep.subr.mxu0 0.0
        %361 = vmatpush1.xpose.msra.mxu0 0.0
        %362 = vmatprep.subr.mxu0 0.0
        %363 = vmatpush1.xpose.msra.mxu0 0.0
        %364 = vmatprep.subr.mxu0 0.0
        %365 = vmatpush1.xpose.msra.mxu0 0.0
        %366 = vmatprep.subr.mxu0 0.0
        %367 = vmatpush1.xpose.msra.mxu0 0.0
        %368 = vmatprep.subr.mxu0 0.0
        %369 = vmatpush1.xpose.msra.mxu0 0.0
        %370 = vmatprep.subr.mxu0 0.0
        %371 = vmatpush1.xpose.msra.mxu0 0.0
        %372 = vmatprep.subr.mxu0 0.0
        %373 = vmatpush1.xpose.msra.mxu0 0.0
        %374 = vmatprep.subr.mxu0 0.0
        %375 = vmatpush1.xpose.msra.mxu0 0.0
        %376 = vmatprep.subr.mxu0 0.0
        %377 = vmatpush1.xpose.msra.mxu0 0.0
        %378 = vmatprep.subr.mxu0 0.0
        %379 = vmatpush1.xpose.msra.mxu0 0.0
        %380 = vmatprep.subr.mxu0 0.0
        %381 = vmatpush1.xpose.msra.mxu0 0.0
        %382 = vmatprep.subr.mxu0 0.0
        %383 = vmatpush1.xpose.msra.mxu0 0.0
        %384 = vmatprep.subr.mxu0 0.0
        %385 = vmatpush1.xpose.msra.mxu0 0.0
        %386 = vmatprep.subr.mxu0 0.0
        %387 = vmatpush1.xpose.msra.mxu0 0.0
        %388 = vmatprep.subr.mxu0 0.0
        %389 = vmatpush1.xpose.msra.mxu0 0.0
        %390 = vmatprep.mubr.f32.mxu0 0.0
        %391 = vmatmul.mubr.f32.gmra.mrb[0].mxu0 %v255
        %v392 = vpop.f32.mrb[0].mxu0
        %v393 = vadd.f32 %v251, %v392
        %v394 = vpop.f32.mrb[0].mxu0
        %395 = vmatprep.mubr.f32.mxu0 0.0
        %396 = vmatmul.mubr.f32.gmra.mrb[0].mxu0 %v258
        %v397 = vpop.f32.mrb[0].mxu0
        %v398 = vadd.f32 %v251, %v397
        %v399 = vpop.f32.mrb[0].mxu0
        %400 = vmatprep.mubr.f32.mxu0 0.0
        %401 = vmatmul.mubr.f32.gmra.mrb[0].mxu0 %v261
        %v402 = vpop.f32.mrb[0].mxu0
        %v403 = vadd.f32 %v251, %v402
        %v404 = vpop.f32.mrb[0].mxu0
        %405 = vmatprep.mubr.f32.mxu0 0.0
        %406 = vmatmul.mubr.f32.gmra.mrb[0].mxu0 %v264
        %v407 = vpop.f32.mrb[0].mxu0
        %v408 = vadd.f32 %v251, %v407
        %v409 = vpop.f32.mrb[0].mxu0
        %410 = vmatprep.mubr.f32.mxu0 0.0
        %411 = vmatmul.mubr.f32.gmra.mrb[0].mxu0 %v267
        %v412 = vpop.f32.mrb[0].mxu0
        %v413 = vadd.f32 %v251, %v412
        %v414 = vpop.f32.mrb[0].mxu0
        %415 = vmatprep.mubr.f32.mxu0 0.0
        %416 = vmatmul.mubr.f32.gmra.mrb[0].mxu0 %v270
        %v417 = vpop.f32.mrb[0].mxu0
        %v418 = vadd.f32 %v251, %v417
        %v419 = vpop.f32.mrb[0].mxu0
        %420 = vmatprep.mubr.f32.mxu0 0.0
        %421 = vmatmul.mubr.f32.gmra.mrb[0].mxu0 %v273
        %v422 = vpop.f32.mrb[0].mxu0
        %v423 = vadd.f32 %v251, %v422
        %v424 = vpop.f32.mrb[0].mxu0
        %425 = vmatprep.mubr.f32.mxu0 0.0
        %426 = vmatmul.mubr.f32.gmra.mrb[0].mxu0 %v276
        %v427 = vpop.f32.mrb[0].mxu0
        %v428 = vadd.f32 %v251, %v427
        %v429 = vpop.f32.mrb[0].mxu0
        %430 = vdwg.mxu0
        %431 = vst [vmem:[%s205] sm:$0xff] %v393
        %432 = vst [vmem:[%s205 + $0x8] sm:$0xff] %v398
        %433 = vst [vmem:[%s205 + $0x10] sm:$0xff] %v403
        %434 = vst [vmem:[%s205 + $0x18] sm:$0xff] %v408
        %435 = vst [vmem:[%s205 + $0x20] sm:$0xff] %v413
        %436 = vst [vmem:[%s205 + $0x28] sm:$0xff] %v418
        %437 = vst [vmem:[%s205 + $0x30] sm:$0xff] %v423
        %438 = vst [vmem:[%s205 + $0x38] sm:$0xff] %v428
        %s439 = sand.u32 %s117, 1
        %s440 = scalar_lea.sflag [#allocation3], %s439
        %s441 = sand.u32 %s117, 1
        %s442 = smul.addr %s441, 64
        %s443 = scalar_lea.vmem [#allocation2], %s442
        // Predicated region
        $region33: #{tpu_custom_call.1} parent=31 // pred_check
          %p444 = pneg %p127
        $region34: #{tpu_custom_call.1} parent=31 // pred_check_branch
          %446 = sbr.rel (%p444) target = $region36
        $region35: #{tpu_custom_call.1} parent=31 // pred_region
          %s447 = smul.u32 8, %s21
          %s449 = ssub.s32 1024, 1024
          %450 = vsyncadd %s440, %s449
          %s451 = sadd.s32 %s22, %s447
          %s452 = smul.addr %s451, 128
          %s453 = scalar_lea.hbm %s3, %s452
          %s454 = sshll.u32 %s443, 4
          %s455 = int_to_ptr.vmem [resolvable:$true] %s454
          %460 = dma.vmem_to_hbm [thread:$0]  %s455, 1024, %s453, %s440, 128, 128, 8
        $region36: #{tpu_custom_call.1} parent=31 // pred_fallthru
          _
      $region32: #{tpu_custom_call.1} parent=5 // pred_fallthru
        _
      %p461 = scmp.le.s32.totalorder 2, %s12
      // Predicated region
      $region37: #{tpu_custom_call.1} parent=5 // pred_check
        %p462 = pneg %p461
      $region38: #{tpu_custom_call.1} parent=5 // pred_check_branch
        %464 = sbr.rel (%p462) target = $region40
      $region39: #{tpu_custom_call.1} parent=5 // pred_region
        %s465 = ssub.s32 %s12, 2
        // Predicated region
        $region41: #{tpu_custom_call.1} parent=39 // pred_check
          %p466 = pneg %p133
        $region42: #{tpu_custom_call.1} parent=39 // pred_check_branch
          %468 = sbr.rel (%p466) target = $region44
        $region43: #{tpu_custom_call.1} parent=39 // pred_region
          %s469 = sand.u32 %s118, 1
          %s470 = scalar_lea.sflag [#allocation3], %s469
          %s471 = sand.u32 %s118, 1
          %s472 = smul.addr %s471, 64
          %s473 = scalar_lea.vmem [#allocation2], %s472
          %474 = dma.done %s470, 1024
        $region44: #{tpu_custom_call.1} parent=39 // pred_fallthru
          _
      $region40: #{tpu_custom_call.1} parent=5 // pred_fallthru
        _
    $region6: #{tpu_custom_call.1} parent=1 // loop_footer
      %s16 = sadd.s32 1, %s12
    $region7: #{tpu_custom_call.1} parent=1 // loop_footer_branch
      %11 = sbr.rel target = $region3
    $region8: #{tpu_custom_call.1} parent=1 // loop_exit
      _
    %475 = vsyncpa [#allocation3], 1
    %s476 = scalar_lea.sflag [#allocation3], 1
    %477 = vsyncpa %s476, 1

</llo_original>
